<compile_context>
chip_gen: v6e
topology: v6e:2x2x1
jax: 0.10.0
libtpu: 0.0.40
codegen_flags: <defaults>
</compile_context>

<pallas_src>
import numpy as np

import jax
import jax.numpy as jnp
from jax.experimental import pallas as pl
from jax.experimental.pallas import tpu as pltpu

# ---- model hyper-parameters (small synthetic config) ------------------------
VOCAB_SIZE = 50
N_CLASS = 4
EMBED_DIM = 32
NUM_FILTERS = 8
FILTER_SIZES = (2, 3, 4)

MAX_F = max(FILTER_SIZES)          # 4
K_DIM = MAX_F * EMBED_DIM          # 128 -> im2col contraction dim == MXU lane width
LANES = 128                        # lane-dense slab width for weights / outputs
SUBLANES = 8
TB = 8                             # batch rows per grid step (sublane multiple)

BATCH = 2
SEQ_LEN = 16


def _round_up(x, m):
    return (x + m - 1) // m * m


# -----------------------------------------------------------------------------
# Kernel
# -----------------------------------------------------------------------------
def textcnn_kernel(x_ref, w_ref, b_ref, m_ref, out_ref):
    """Fused conv(x3) + ReLU + mask + max-pool + FC + sigmoid for one batch tile.

    x_ref  : (TB*P, 128) bf16  im2col'd embeddings (4 stacked shifts of E=32)
    w_ref  : (256, 128)  bf16  rows [0,128): fused conv weights (zero padded),
                               rows [128,256): zero-padded FC weights
    b_ref  : (2, 128)    f32   row 0: conv bias (padded), row 1: FC bias (padded)
    m_ref  : (P, 128)    f32   {0,1} window-validity mask (per filter-size column group)
    out_ref: (TB, 128)   f32   sigmoid(logits); cols >= N_CLASS are don't-care
    """
    TBP, K = x_ref.shape
    TBATCH = out_ref.shape[0]
    P = TBP // TBATCH

    # One MXU pass for all three convs: (TB*P, 128) @ (128, 128), f32 accumulate.
    conv = jnp.dot(x_ref[...], w_ref[:K, :],
                   preferred_element_type=jnp.float32)            # (TB*P, 128)
    conv = conv + b_ref[0:1, :]                                    # conv bias
    conv = jnp.maximum(conv, 0.0)                                  # ReLU

    # Zero out window positions past each filter's true output length (and the
    # zero-padded columns).  Safe post-ReLU: all valid values are >= 0.
    conv = conv.reshape(TBATCH, P, LANES) * m_ref[...]             # (TB, P, 128)

    pooled = jnp.max(conv, axis=1)                                 # (TB, 128)

    # Fused FC: (TB, 128) @ (128, 128); only rows[:3F] / cols[:N_CLASS] non-zero.
    logits = jnp.dot(pooled.astype(w_ref.dtype), w_ref[K:, :],
                     preferred_element_type=jnp.float32) + b_ref[1:2, :]
    out_ref[...] = jax.nn.sigmoid(logits)


# -----------------------------------------------------------------------------
# One-time parameter packing (hoisted out of the forward pass)
# -----------------------------------------------------------------------------
def pack_params(params, seq_len):
    """Pack conv/FC params into MXU-friendly slabs + the window-validity mask.

    Returns (w_slab (256,128) bf16, b_slab (2,128) f32, win_mask (P_pad,128) f32).
    """
    assert seq_len >= MAX_F, "need >= 1 valid window per filter size (S >= 4)"
    E, F = EMBED_DIM, NUM_FILTERS

    # Fused conv weight slab (128, 128): column block i*F:(i+1)*F holds the
    # conv with filter size FILTER_SIZES[i]; unused rows/cols are zero.
    w_conv = jnp.zeros((K_DIM, LANES), jnp.float32)
    b_conv = jnp.zeros((LANES,), jnp.float32)
    for i, f in enumerate(FILTER_SIZES):
        w = params[f'conv{f}_w'][:, 0]                     # (F, f, E) torch layout
        w = jnp.transpose(w, (1, 2, 0)).reshape(f * E, F)  # [j*E+e, n] = W[n,0,j,e]
        w_conv = w_conv.at[:f * E, i * F:(i + 1) * F].set(w)
        b_conv = b_conv.at[i * F:(i + 1) * F].set(params[f'conv{f}_b'])

    # Padded FC slab (128, 128) and bias.
    w_fc = jnp.zeros((LANES, LANES), jnp.float32)
    w_fc = w_fc.at[:3 * F, :N_CLASS].set(params['fc_w'].T)
    b_fc = jnp.zeros((LANES,), jnp.float32).at[:N_CLASS].set(params['fc_b'])

    w_slab = jnp.concatenate([w_conv, w_fc], axis=0).astype(jnp.bfloat16)  # (256,128)
    b_slab = jnp.stack([b_conv, b_fc], axis=0)                             # (2,128) f32

    # Window-validity mask: filter size f has (seq_len - f + 1) valid windows.
    p_real = seq_len - min(FILTER_SIZES) + 1
    p_pad = _round_up(p_real, SUBLANES)
    mask = np.zeros((p_pad, LANES), np.float32)
    for i, f in enumerate(FILTER_SIZES):
        mask[:seq_len - f + 1, i * F:(i + 1) * F] = 1.0
    win_mask = jnp.asarray(mask)

    return w_slab, b_slab, win_mask


# -----------------------------------------------------------------------------
# Jitted forward
# -----------------------------------------------------------------------------
@jax.jit
def textcnn_forward(x_tokens, embedding, w_slab, b_slab, win_mask):
    """x_tokens: (B, S) int32 token ids -> (B, N_CLASS) sigmoid probabilities."""
    B, S = x_tokens.shape
    E = EMBED_DIM
    P = win_mask.shape[0]                      # padded window count (mult of 8)
    B_pad = _round_up(B, TB)

    # ---- glue (fused under jit): embedding gather + im2col ----
    emb = embedding[x_tokens].astype(jnp.float32)                  # (B, S, E)
    emb = jnp.pad(emb, ((0, B_pad - B), (0, P + MAX_F - 1 - S), (0, 0)))
    # window l holds emb rows l..l+3  ->  contraction dim exactly 4*E = 128
    x_col = jnp.concatenate([emb[:, j:j + P, :] for j in range(MAX_F)],
                            axis=-1)                               # (B_pad, P, 4E)
    x_col = x_col.reshape(B_pad * P, MAX_F * E).astype(jnp.bfloat16)

    n_btiles = B_pad // TB
    out_padded = pl.pallas_call(
        textcnn_kernel,
        out_shape=jax.ShapeDtypeStruct((B_pad, LANES), jnp.float32),
        grid_spec=pltpu.PrefetchScalarGridSpec(
            num_scalar_prefetch=0,
            grid=(n_btiles,),
            in_specs=[
                # activations: one batch tile per grid step (double-buffered)
                pl.BlockSpec((TB * P, LANES), lambda i: (i, 0)),
                # weights / bias / mask: constant index_map -> resident in VMEM
                pl.BlockSpec((2 * LANES, LANES), lambda i: (0, 0)),
                pl.BlockSpec((2, LANES), lambda i: (0, 0)),
                pl.BlockSpec((P, LANES), lambda i: (0, 0)),
            ],
            out_specs=pl.BlockSpec((TB, LANES), lambda i: (i, 0)),
        ),
        compiler_params=pltpu.CompilerParams(
            dimension_semantics=("parallel",)),   # 2x on v7x dual-TC at large B
    )(x_col, w_slab, b_slab, win_mask)

    return out_padded[:B, :N_CLASS]


# -----------------------------------------------------------------------------
# Pure-JAX f32 reference of the PyTorch forward (sanity check)
# -----------------------------------------------------------------------------
def textcnn_reference(x_tokens, params):
    emb = params['embedding'][x_tokens].astype(jnp.float32)   # (B, S, E)
    S = emb.shape[1]
    pooled = []
    for f in FILTER_SIZES:
        w = params[f'conv{f}_w'][:, 0]                        # (F, f, E)
        b = params[f'conv{f}_b']
        L = S - f + 1
        acc = sum(jnp.einsum('ble,ne->bln', emb[:, j:j + L, :], w[:, j, :])
                  for j in range(f)) + b
        acc = jnp.maximum(acc, 0.0)
        pooled.append(jnp.max(acc, axis=1))
    feat = jnp.concatenate(pooled, axis=-1)
    logits = feat @ params['fc_w'].T + params['fc_b']
    return jax.nn.sigmoid(logits)


def init_params(key):
    ks = jax.random.split(key, 3 + 2 * len(FILTER_SIZES))
    params = {
        'embedding': jax.random.normal(ks[0], (VOCAB_SIZE, EMBED_DIM), jnp.float32) * 0.1,
        'fc_w': jax.random.normal(ks[1], (N_CLASS, NUM_FILTERS * 3), jnp.float32) * 0.1,
        'fc_b': jax.random.normal(ks[2], (N_CLASS,), jnp.float32) * 0.1,
    }
    for i, f in enumerate(FILTER_SIZES):
        params[f'conv{f}_w'] = jax.random.normal(
            ks[3 + 2 * i], (NUM_FILTERS, 1, f, EMBED_DIM), jnp.float32) * 0.1
        params[f'conv{f}_b'] = jax.random.normal(
            ks[4 + 2 * i], (NUM_FILTERS,), jnp.float32) * 0.1
    return params


if __name__ == "__main__":
    key = jax.random.PRNGKey(0)
    k_param, k_x = jax.random.split(key)
    params = init_params(k_param)
    x = jax.random.randint(k_x, (BATCH, SEQ_LEN), 0, VOCAB_SIZE, dtype=jnp.int32)

    # One-time parameter packing (hoisted out of the per-call forward).
    w_slab, b_slab, win_mask = pack_params(params, SEQ_LEN)

    out = textcnn_forward(x, params['embedding'], w_slab, b_slab, win_mask)
    out = jax.block_until_ready(out)
    assert out.shape == (BATCH, N_CLASS)
    assert bool(jnp.all(jnp.isfinite(out)))

    # Sanity check against f32 reference (kernel uses bf16 matmul inputs).
    ref = jax.block_until_ready(textcnn_reference(x, params))
    assert bool(jnp.allclose(out, ref, atol=5e-2)), \
        f"max diff {float(jnp.max(jnp.abs(out - ref)))}"

    print("KERNEL_OK")
</pallas_src>

<mosaic_0001>
module attributes {stable_mosaic.version = 11 : i64} {
  func.func @textcnn_kernel(%arg0: i32, %arg1: memref<128x128xbf16, #tpu.memory_space<vmem>>, %arg2: memref<256x128xbf16, #tpu.memory_space<vmem>>, %arg3: memref<2x128xf32, #tpu.memory_space<vmem>>, %arg4: memref<16x128xf32, #tpu.memory_space<vmem>>, %arg5: memref<8x128xf32, #tpu.memory_space<vmem>>) attributes {dimension_semantics = [#tpu.dimension_semantics<parallel>], iteration_bounds = array<i64: 1>, scalar_prefetch = 0 : i64, scratch_operands = 0 : i64, tpu.core_type = #tpu.core_type<tc>, window_params = [{transform_indices = @transform_0, window_bounds = array<i64: 128, 128>}, {pipeline_mode = #tpu.pipeline_mode<synchronous>, transform_indices = @transform_1, window_bounds = array<i64: 256, 128>}, {pipeline_mode = #tpu.pipeline_mode<synchronous>, transform_indices = @transform_2, window_bounds = array<i64: 2, 128>}, {pipeline_mode = #tpu.pipeline_mode<synchronous>, transform_indices = @transform_3, window_bounds = array<i64: 16, 128>}, {transform_indices = @transform_4, window_bounds = array<i64: 8, 128>}]} {
    %c0 = arith.constant 0 : index
    %c0_0 = arith.constant 0 : index
    %0 = vector.load %arg1[%c0, %c0_0] : memref<128x128xbf16, #tpu.memory_space<vmem>>, vector<128x128xbf16>
    %c0_1 = arith.constant 0 : index
    %c0_2 = arith.constant 0 : index
    %1 = vector.load %arg2[%c0_1, %c0_2] : memref<256x128xbf16, #tpu.memory_space<vmem>>, vector<128x128xbf16>
    %cst = arith.constant dense<0.000000e+00> : vector<128x128xf32>
    %2 = tpu.matmul %0, %1, %cst {dimension_numbers = #tpu.dot_dimension_numbers<[1], [0], [0], [1], [0, 0, 1, 1], [], []>} : vector<128x128xbf16>, vector<128x128xbf16>, vector<128x128xf32> -> vector<128x128xf32>
    %c0_3 = arith.constant 0 : index
    %c0_4 = arith.constant 0 : index
    %3 = vector.load %arg3[%c0_3, %c0_4] : memref<2x128xf32, #tpu.memory_space<vmem>>, vector<1x128xf32>
    %4 = vector.broadcast %3 : vector<1x128xf32> to vector<128x128xf32>
    %5 = arith.addf %2, %4 : vector<128x128xf32>
    %cst_5 = arith.constant 0.000000e+00 : f32
    %6 = vector.broadcast %cst_5 : f32 to vector<128x128xf32>
    %7 = arith.maximumf %5, %6 : vector<128x128xf32>
    %8 = vector.shape_cast %7 : vector<128x128xf32> to vector<8x16x128xf32>
    %c0_6 = arith.constant 0 : index
    %c0_7 = arith.constant 0 : index
    %9 = vector.load %arg4[%c0_6, %c0_7] : memref<16x128xf32, #tpu.memory_space<vmem>>, vector<16x128xf32>
    %10 = vector.shape_cast %9 : vector<16x128xf32> to vector<1x16x128xf32>
    %11 = vector.broadcast %10 : vector<1x16x128xf32> to vector<8x16x128xf32>
    %12 = arith.mulf %8, %11 : vector<8x16x128xf32>
    %cst_8 = arith.constant dense<0xFF800000> : vector<8x128xf32>
    %13 = vector.multi_reduction <maximumf>, %12, %cst_8 [1] : vector<8x16x128xf32> to vector<8x128xf32>
    %14 = arith.truncf %13 : vector<8x128xf32> to vector<8x128xbf16>
    %c128 = arith.constant 128 : index
    %c0_9 = arith.constant 0 : index
    %15 = vector.load %arg2[%c128, %c0_9] : memref<256x128xbf16, #tpu.memory_space<vmem>>, vector<128x128xbf16>
    %cst_10 = arith.constant dense<0.000000e+00> : vector<8x128xf32>
    %16 = tpu.matmul %14, %15, %cst_10 {dimension_numbers = #tpu.dot_dimension_numbers<[1], [0], [0], [1], [0, 0, 1, 1], [], []>} : vector<8x128xbf16>, vector<128x128xbf16>, vector<8x128xf32> -> vector<8x128xf32>
    %c1 = arith.constant 1 : index
    %c0_11 = arith.constant 0 : index
    %17 = vector.load %arg3[%c1, %c0_11] : memref<2x128xf32, #tpu.memory_space<vmem>>, vector<1x128xf32>
    %18 = vector.broadcast %17 : vector<1x128xf32> to vector<8x128xf32>
    %19 = arith.addf %16, %18 : vector<8x128xf32>
    %20 = arith.negf %19 : vector<8x128xf32>
    %21 = math.exp %20 : vector<8x128xf32>
    %cst_12 = arith.constant 1.000000e+00 : f32
    %22 = vector.broadcast %cst_12 : f32 to vector<8x128xf32>
    %23 = arith.addf %22, %21 : vector<8x128xf32>
    %24 = arith.divf %22, %23 : vector<8x128xf32>
    %c0_13 = arith.constant 0 : index
    %c0_14 = arith.constant 0 : index
    %25 = vector.load %arg5[%c0_13, %c0_14] : memref<8x128xf32, #tpu.memory_space<vmem>>, vector<8x128xf32>
    tpu.vector_store %arg5[%c0_13, %c0_14], %24 {strides = array<i32>} : memref<8x128xf32, #tpu.memory_space<vmem>>, vector<8x128xf32>,
    return
  }
  func.func @transform_0(%arg0: i32) -> (i32, i32) {
    %c0_i32 = arith.constant 0 : i32
    %c0_i32_0 = arith.constant 0 : i32
    return %arg0, %c0_i32 : i32, i32
  }
  func.func @transform_1(%arg0: i32) -> (i32, i32) {
    %c0_i32 = arith.constant 0 : i32
    %c0_i32_0 = arith.constant 0 : i32
    %c0_i32_1 = arith.constant 0 : i32
    return %c0_i32, %c0_i32_0 : i32, i32
  }
  func.func @transform_2(%arg0: i32) -> (i32, i32) {
    %c0_i32 = arith.constant 0 : i32
    %c0_i32_0 = arith.constant 0 : i32
    %c0_i32_1 = arith.constant 0 : i32
    return %c0_i32, %c0_i32_0 : i32, i32
  }
  func.func @transform_3(%arg0: i32) -> (i32, i32) {
    %c0_i32 = arith.constant 0 : i32
    %c0_i32_0 = arith.constant 0 : i32
    %c0_i32_1 = arith.constant 0 : i32
    return %c0_i32, %c0_i32_0 : i32, i32
  }
  func.func @transform_4(%arg0: i32) -> (i32, i32) {
    %c0_i32 = arith.constant 0 : i32
    %c0_i32_0 = arith.constant 0 : i32
    return %arg0, %c0_i32 : i32, i32
  }
}

</mosaic_0001>

<llo_original>
// kernel: textcnn_forward.1
$region0: #{textcnn_forward.1}
  #allocation0 [shape = 'u32[]', space=smem, size = 0x4, offset = 0x4, fixed_abs, tag = 'smem constant byte address 0x4 - core index']
  #allocation1 [shape = 'u32[144,128]{1,0:T(1,128)}', space=vmem, size = 0x12000, scoped, tag = 'internal scratch']
  %s0 = inlined_call_operand.vmem [shape: bf16[128,128], index: 0, kind: input, shape index: {}]
  %s1 = inlined_call_operand.vmem [shape: bf16[256,128], index: 1, kind: input, shape index: {}]
  %s2 = inlined_call_operand.vmem [shape: f32[2,128], index: 2, kind: input, shape index: {}]
  %s3 = inlined_call_operand.vmem [shape: f32[16,128], index: 3, kind: input, shape index: {}]
  %s4 = inlined_call_operand.vmem [shape: f32[8,128], index: 4, kind: output, shape index: {}]
  %s5 = sld [smem:[#allocation0]]
  $region26: #{textcnn_forward.1} parent=0
    _
  %s7 = ssub.s32 1, %s5
  %s8 = scalar_select 0, %s7, %s5
  // Predicated region
  $region2: #{textcnn_forward.1} parent=0 // pred_check
    _
  $region3: #{textcnn_forward.1} parent=0 // pred_check_branch
    %10 = sbr.rel (0) target = $region5
  $region4: #{textcnn_forward.1} parent=0 // pred_region
    _
  $region5: #{textcnn_forward.1} parent=0 // pred_fallthru
    _
  // Predicated region
  $region6: #{textcnn_forward.1} parent=0 // pred_check
    _
  $region7: #{textcnn_forward.1} parent=0 // pred_check_branch
    %12 = sbr.rel (0) target = $region9
  $region8: #{textcnn_forward.1} parent=0 // pred_region
    _
  $region9: #{textcnn_forward.1} parent=0 // pred_fallthru
    _
  // Predicated region
  $region10: #{textcnn_forward.1} parent=0 // pred_check
    _
  $region11: #{textcnn_forward.1} parent=0 // pred_check_branch
    %14 = sbr.rel (0) target = $region13
  $region12: #{textcnn_forward.1} parent=0 // pred_region
    _
  $region13: #{textcnn_forward.1} parent=0 // pred_fallthru
    _
  // Predicated region
  $region14: #{textcnn_forward.1} parent=0 // pred_check
    _
  $region15: #{textcnn_forward.1} parent=0 // pred_check_branch
    %16 = sbr.rel (0) target = $region17
  $region16: #{textcnn_forward.1} parent=0 // pred_region
    _
  $region17: #{textcnn_forward.1} parent=0 // pred_fallthru
    _
  %v18 = vld [vmem:[%s0] sm:$0xf]
  %v19 = vld [vmem:[%s0 + $0x4] sm:$0xf]
  %v20 = vld [vmem:[%s0 + $0x8] sm:$0xf]
  %v21 = vld [vmem:[%s0 + $0xc] sm:$0xf]
  %v22 = vld [vmem:[%s0 + $0x10] sm:$0xf]
  %v23 = vld [vmem:[%s0 + $0x14] sm:$0xf]
  %v24 = vld [vmem:[%s0 + $0x18] sm:$0xf]
  %v25 = vld [vmem:[%s0 + $0x1c] sm:$0xf]
  %v26 = vld [vmem:[%s0 + $0x20] sm:$0xf]
  %v27 = vld [vmem:[%s0 + $0x24] sm:$0xf]
  %v28 = vld [vmem:[%s0 + $0x28] sm:$0xf]
  %v29 = vld [vmem:[%s0 + $0x2c] sm:$0xf]
  %v30 = vld [vmem:[%s0 + $0x30] sm:$0xf]
  %v31 = vld [vmem:[%s0 + $0x34] sm:$0xf]
  %v32 = vld [vmem:[%s0 + $0x38] sm:$0xf]
  %v33 = vld [vmem:[%s0 + $0x3c] sm:$0xf]
  %v34 = vld [vmem:[%s1] sm:$0xf]
  %v35 = vld [vmem:[%s1 + $0x4] sm:$0xf]
  %v36 = vld [vmem:[%s1 + $0x8] sm:$0xf]
  %v37 = vld [vmem:[%s1 + $0xc] sm:$0xf]
  %v38 = vld [vmem:[%s1 + $0x10] sm:$0xf]
  %v39 = vld [vmem:[%s1 + $0x14] sm:$0xf]
  %v40 = vld [vmem:[%s1 + $0x18] sm:$0xf]
  %v41 = vld [vmem:[%s1 + $0x1c] sm:$0xf]
  %v42 = vld [vmem:[%s1 + $0x20] sm:$0xf]
  %v43 = vld [vmem:[%s1 + $0x24] sm:$0xf]
  %v44 = vld [vmem:[%s1 + $0x28] sm:$0xf]
  %v45 = vld [vmem:[%s1 + $0x2c] sm:$0xf]
  %v46 = vld [vmem:[%s1 + $0x30] sm:$0xf]
  %v47 = vld [vmem:[%s1 + $0x34] sm:$0xf]
  %v48 = vld [vmem:[%s1 + $0x38] sm:$0xf]
  %v49 = vld [vmem:[%s1 + $0x3c] sm:$0xf]
  %v50 = vld [vmem:[%s2] sm:$0x1]
  %v51 = vlaneseq
  %v52 = vshrl.u32 %v51, 7
  %v53 = vsub.s32 0, %v52
  %v54 = vrot.slane %v50, %v53
  %v71 = vunpack.c.l.b16 %v18
  %v72 = vunpack.c.l.b16 %v19
  %v73 = vunpack.c.l.b16 %v20
  %v74 = vunpack.c.l.b16 %v21
  %v75 = vunpack.c.l.b16 %v22
  %v76 = vunpack.c.l.b16 %v23
  %v77 = vunpack.c.l.b16 %v24
  %v78 = vunpack.c.l.b16 %v25
  %v79 = vunpack.c.l.b16 %v26
  %v80 = vunpack.c.l.b16 %v27
  %v81 = vunpack.c.l.b16 %v28
  %v82 = vunpack.c.l.b16 %v29
  %v83 = vunpack.c.l.b16 %v30
  %v84 = vunpack.c.l.b16 %v31
  %v85 = vunpack.c.l.b16 %v32
  %v86 = vunpack.c.l.b16 %v33
  %v87 = vpack.c.b16 %v72, %v71
  %v88 = vpack.c.b16 %v74, %v73
  %v89 = vpack.c.b16 %v76, %v75
  %v90 = vpack.c.b16 %v78, %v77
  %v91 = vpack.c.b16 %v80, %v79
  %v92 = vpack.c.b16 %v82, %v81
  %v93 = vpack.c.b16 %v84, %v83
  %v94 = vpack.c.b16 %v86, %v85
  %v119 = vunpack.c.l.b16 %v34
  %v120 = vunpack.c.l.b16 %v35
  %v121 = vunpack.c.l.b16 %v36
  %v122 = vunpack.c.l.b16 %v37
  %v123 = vunpack.c.l.b16 %v38
  %v124 = vunpack.c.l.b16 %v39
  %v125 = vunpack.c.l.b16 %v40
  %v126 = vunpack.c.l.b16 %v41
  %v127 = vunpack.c.l.b16 %v42
  %v128 = vunpack.c.l.b16 %v43
  %v129 = vunpack.c.l.b16 %v44
  %v130 = vunpack.c.l.b16 %v45
  %v131 = vunpack.c.l.b16 %v46
  %v132 = vunpack.c.l.b16 %v47
  %v133 = vunpack.c.l.b16 %v48
  %v134 = vunpack.c.l.b16 %v49
  %v135 = vpack.c.b16 %v120, %v119
  %v136 = vpack.c.b16 %v122, %v121
  %v137 = vpack.c.b16 %v124, %v123
  %v138 = vpack.c.b16 %v126, %v125
  %v139 = vpack.c.b16 %v128, %v127
  %v140 = vpack.c.b16 %v130, %v129
  %v141 = vpack.c.b16 %v132, %v131
  %v142 = vpack.c.b16 %v134, %v133
  %151 = vmatprep.subr.bf16.mxu0 0
  %152 = vmatpush1.bf16.msra.mxu0 %v142
  %153 = vmatprep.subr.bf16.mxu0 0
  %154 = vmatpush1.bf16.msra.mxu0 %v141
  %155 = vmatprep.subr.bf16.mxu0 0
  %156 = vmatpush1.bf16.msra.mxu0 %v140
  %157 = vmatprep.subr.bf16.mxu0 0
  %158 = vmatpush1.bf16.msra.mxu0 %v139
  %159 = vmatprep.subr.bf16.mxu0 0
  %160 = vmatpush1.bf16.msra.mxu0 %v138
  %161 = vmatprep.subr.bf16.mxu0 0
  %162 = vmatpush1.bf16.msra.mxu0 %v137
  %163 = vmatprep.subr.bf16.mxu0 0
  %164 = vmatpush1.bf16.msra.mxu0 %v136
  %165 = vmatprep.subr.bf16.mxu0 0
  %166 = vmatpush1.bf16.msra.mxu0 %v135
  %167 = vmatprep.subr.bf16.mxu0 0
  %168 = vmatpush2.bf16.msra.mxu0 0
  %169 = vmatprep.subr.bf16.mxu0 0
  %170 = vmatpush2.bf16.msra.mxu0 0
  %171 = vmatprep.subr.bf16.mxu0 0
  %172 = vmatpush2.bf16.msra.mxu0 0
  %173 = vmatprep.subr.bf16.mxu0 0
  %174 = vmatpush2.bf16.msra.mxu0 0
  %175 = vmatprep.subr.bf16.mxu0 0
  %176 = vmatpush2.bf16.msra.mxu0 0
  %177 = vmatprep.subr.bf16.mxu0 0
  %178 = vmatpush2.bf16.msra.mxu0 0
  %179 = vmatprep.subr.bf16.mxu0 0
  %180 = vmatpush2.bf16.msra.mxu0 0
  %181 = vmatprep.subr.bf16.mxu0 0
  %182 = vmatpush2.bf16.msra.mxu0 0
  %183 = vmatprep.mubr.bf16.mxu0 0
  %184 = vmatmul.mubr.bf16.gmra.mxu0 %v87
  %v185 = vpop.f32.mrf.mxu0
  %v186 = vadd.f32 %v54, %v185
  %v187 = vpop.f32.mrf.mxu0
  %v188 = vpop.f32.mrf.mxu0
  %v189 = vadd.f32 %v54, %v188
  %v190 = vpop.f32.mrf.mxu0
  %191 = vmatprep.mubr.bf16.mxu0 0
  %192 = vmatmul.mubr.bf16.gmra.mxu0 %v88
  %v193 = vpop.f32.mrf.mxu0
  %v194 = vadd.f32 %v54, %v193
  %v195 = vpop.f32.mrf.mxu0
  %v196 = vpop.f32.mrf.mxu0
  %v197 = vadd.f32 %v54, %v196
  %v198 = vpop.f32.mrf.mxu0
  %199 = vmatprep.mubr.bf16.mxu0 0
  %200 = vmatmul.mubr.bf16.gmra.mxu0 %v89
  %v201 = vpop.f32.mrf.mxu0
  %v202 = vadd.f32 %v54, %v201
  %v203 = vpop.f32.mrf.mxu0
  %v204 = vpop.f32.mrf.mxu0
  %v205 = vadd.f32 %v54, %v204
  %v206 = vpop.f32.mrf.mxu0
  %207 = vmatprep.mubr.bf16.mxu0 0
  %208 = vmatmul.mubr.bf16.gmra.mxu0 %v90
  %v209 = vpop.f32.mrf.mxu0
  %v210 = vadd.f32 %v54, %v209
  %v211 = vpop.f32.mrf.mxu0
  %v212 = vpop.f32.mrf.mxu0
  %v213 = vadd.f32 %v54, %v212
  %v214 = vpop.f32.mrf.mxu0
  %215 = vmatprep.mubr.bf16.mxu0 0
  %216 = vmatmul.mubr.bf16.gmra.mxu0 %v91
  %v217 = vpop.f32.mrf.mxu0
  %v218 = vadd.f32 %v54, %v217
  %v219 = vpop.f32.mrf.mxu0
  %v220 = vpop.f32.mrf.mxu0
  %v221 = vadd.f32 %v54, %v220
  %v222 = vpop.f32.mrf.mxu0
  %223 = vmatprep.mubr.bf16.mxu0 0
  %224 = vmatmul.mubr.bf16.gmra.mxu0 %v92
  %v225 = vpop.f32.mrf.mxu0
  %v226 = vadd.f32 %v54, %v225
  %v227 = vpop.f32.mrf.mxu0
  %v228 = vpop.f32.mrf.mxu0
  %v229 = vadd.f32 %v54, %v228
  %v230 = vpop.f32.mrf.mxu0
  %231 = vmatprep.mubr.bf16.mxu0 0
  %232 = vmatmul.mubr.bf16.gmra.mxu0 %v93
  %v233 = vpop.f32.mrf.mxu0
  %v234 = vadd.f32 %v54, %v233
  %v235 = vpop.f32.mrf.mxu0
  %v236 = vpop.f32.mrf.mxu0
  %v237 = vadd.f32 %v54, %v236
  %v238 = vpop.f32.mrf.mxu0
  %239 = vmatprep.mubr.bf16.mxu0 0
  %240 = vmatmul.mubr.bf16.gmra.mxu0 %v94
  %v241 = vpop.f32.mrf.mxu0
  %v242 = vadd.f32 %v54, %v241
  %v243 = vpop.f32.mrf.mxu0
  %v244 = vpop.f32.mrf.mxu0
  %v245 = vadd.f32 %v54, %v244
  %v246 = vpop.f32.mrf.mxu0
  %247 = vdwg.mxu0
  %v248 = vmax.f32 %v186, 0.0
  %v249 = vmax.f32 %v189, 0.0
  %v250 = vmax.f32 %v194, 0.0
  %v251 = vmax.f32 %v197, 0.0
  %v252 = vmax.f32 %v202, 0.0
  %v253 = vmax.f32 %v205, 0.0
  %v254 = vmax.f32 %v210, 0.0
  %v255 = vmax.f32 %v213, 0.0
  %v256 = vmax.f32 %v218, 0.0
  %v257 = vmax.f32 %v221, 0.0
  %v258 = vmax.f32 %v226, 0.0
  %v259 = vmax.f32 %v229, 0.0
  %v260 = vmax.f32 %v234, 0.0
  %v261 = vmax.f32 %v237, 0.0
  %v262 = vmax.f32 %v242, 0.0
  %v263 = vmax.f32 %v245, 0.0
  %v264 = vld [vmem:[%s3] sm:$0xff]
  %v265 = vld [vmem:[%s3 + $0x8] sm:$0xff]
  %v266 = vmul.f32 %v248, %v264
  %v267 = vmul.f32 %v249, %v265
  %v268 = vmul.f32 %v250, %v264
  %v269 = vmul.f32 %v251, %v265
  %v270 = vmul.f32 %v252, %v264
  %v271 = vmul.f32 %v253, %v265
  %v272 = vmul.f32 %v254, %v264
  %v273 = vmul.f32 %v255, %v265
  %v274 = vmul.f32 %v256, %v264
  %v275 = vmul.f32 %v257, %v265
  %v276 = vmul.f32 %v258, %v264
  %v277 = vmul.f32 %v259, %v265
  %v278 = vmul.f32 %v260, %v264
  %v279 = vmul.f32 %v261, %v265
  %v280 = vmul.f32 %v262, %v264
  %v281 = vmul.f32 %v263, %v265
  %v282 = vmax.f32 %v266, %v267
  %v283 = vrot.slane %v282, 4
  %v284 = vmax.f32 %v282, %v283
  %v285 = vrot.slane %v284, 2
  %v286 = vmax.f32 %v284, %v285
  %v287 = vrot.slane %v286, 1
  %v288 = vmax.f32 %v286, %v287
  %v289 = vmax.f32 %v268, %v269
  %v290 = vrot.slane %v289, 4
  %v291 = vmax.f32 %v289, %v290
  %v292 = vrot.slane %v291, 2
  %v293 = vmax.f32 %v291, %v292
  %v294 = vrot.slane %v293, 1
  %v295 = vmax.f32 %v293, %v294
  %v296 = vmax.f32 %v270, %v271
  %v297 = vrot.slane %v296, 4
  %v298 = vmax.f32 %v296, %v297
  %v299 = vrot.slane %v298, 2
  %v300 = vmax.f32 %v298, %v299
  %v301 = vrot.slane %v300, 1
  %v302 = vmax.f32 %v300, %v301
  %v303 = vmax.f32 %v272, %v273
  %v304 = vrot.slane %v303, 4
  %v305 = vmax.f32 %v303, %v304
  %v306 = vrot.slane %v305, 2
  %v307 = vmax.f32 %v305, %v306
  %v308 = vrot.slane %v307, 1
  %v309 = vmax.f32 %v307, %v308
  %v310 = vmax.f32 %v274, %v275
  %v311 = vrot.slane %v310, 4
  %v312 = vmax.f32 %v310, %v311
  %v313 = vrot.slane %v312, 2
  %v314 = vmax.f32 %v312, %v313
  %v315 = vrot.slane %v314, 1
  %v316 = vmax.f32 %v314, %v315
  %v317 = vmax.f32 %v276, %v277
  %v318 = vrot.slane %v317, 4
  %v319 = vmax.f32 %v317, %v318
  %v320 = vrot.slane %v319, 2
  %v321 = vmax.f32 %v319, %v320
  %v322 = vrot.slane %v321, 1
  %v323 = vmax.f32 %v321, %v322
  %v324 = vmax.f32 %v278, %v279
  %v325 = vrot.slane %v324, 4
  %v326 = vmax.f32 %v324, %v325
  %v327 = vrot.slane %v326, 2
  %v328 = vmax.f32 %v326, %v327
  %v329 = vrot.slane %v328, 1
  %v330 = vmax.f32 %v328, %v329
  %v331 = vmax.f32 %v280, %v281
  %v332 = vrot.slane %v331, 4
  %v333 = vmax.f32 %v331, %v332
  %v334 = vrot.slane %v333, 2
  %v335 = vmax.f32 %v333, %v334
  %v336 = vrot.slane %v335, 1
  %v337 = vmax.f32 %v335, %v336
  %v338 = vpack.c.bf16 %v288, %v288
  %v339 = vpack.c.bf16 %v295, %v295
  %v340 = vpack.c.bf16 %v302, %v302
  %v341 = vpack.c.bf16 %v309, %v309
  %v342 = vpack.c.bf16 %v316, %v316
  %v343 = vpack.c.bf16 %v323, %v323
  %v344 = vpack.c.bf16 %v330, %v330
  %v345 = vpack.c.bf16 %v337, %v337
  %v346 = vld [vmem:[%s1 + $0x40] sm:$0xf]
  %v347 = vld [vmem:[%s1 + $0x44] sm:$0xf]
  %v348 = vld [vmem:[%s1 + $0x48] sm:$0xf]
  %v349 = vld [vmem:[%s1 + $0x4c] sm:$0xf]
  %v350 = vld [vmem:[%s1 + $0x50] sm:$0xf]
  %v351 = vld [vmem:[%s1 + $0x54] sm:$0xf]
  %v352 = vld [vmem:[%s1 + $0x58] sm:$0xf]
  %v353 = vld [vmem:[%s1 + $0x5c] sm:$0xf]
  %v354 = vld [vmem:[%s1 + $0x60] sm:$0xf]
  %v355 = vld [vmem:[%s1 + $0x64] sm:$0xf]
  %v356 = vld [vmem:[%s1 + $0x68] sm:$0xf]
  %v357 = vld [vmem:[%s1 + $0x6c] sm:$0xf]
  %v358 = vld [vmem:[%s1 + $0x70] sm:$0xf]
  %v359 = vld [vmem:[%s1 + $0x74] sm:$0xf]
  %v360 = vld [vmem:[%s1 + $0x78] sm:$0xf]
  %v361 = vld [vmem:[%s1 + $0x7c] sm:$0xf]
  %v362 = vld [vmem:[%s2 + $0x1] sm:$0x1]
  %v363 = vlaneseq
  %v364 = vshrl.u32 %v363, 7
  %v365 = vsub.s32 0, %v364
  %v366 = vrot.slane %v362, %v365
  %v375 = vunpack.c.l.b16 %v338
  %v376 = vunpack.c.l.b16 %v339
  %v377 = vunpack.c.l.b16 %v340
  %v378 = vunpack.c.l.b16 %v341
  %v379 = vunpack.c.l.b16 %v342
  %v380 = vunpack.c.l.b16 %v343
  %v381 = vunpack.c.l.b16 %v344
  %v382 = vunpack.c.l.b16 %v345
  %vm383 = vcmask 1041409
  %v384 = vsel %vm383, %v376, %v375
  %vm385 = vcmask 1042434
  %v386 = vsel %vm385, %v377, %v384
  %vm387 = vcmask 1043459
  %v388 = vsel %vm387, %v378, %v386
  %vm389 = vcmask 1044484
  %v390 = vsel %vm389, %v379, %v388
  %vm391 = vcmask 1045509
  %v392 = vsel %vm391, %v380, %v390
  %vm393 = vcmask 1046534
  %v394 = vsel %vm393, %v381, %v392
  %vm395 = vcmask 1047559
  %v396 = vsel %vm395, %v382, %v394
  %v397 = vpack.c.b16 %v396, %v396
  %v415 = vunpack.c.l.b16 %v346
  %v416 = vunpack.c.l.b16 %v347
  %v417 = vunpack.c.l.b16 %v348
  %v418 = vunpack.c.l.b16 %v349
  %v419 = vunpack.c.l.b16 %v350
  %v420 = vunpack.c.l.b16 %v351
  %v421 = vunpack.c.l.b16 %v352
  %v422 = vunpack.c.l.b16 %v353
  %v423 = vunpack.c.l.b16 %v354
  %v424 = vunpack.c.l.b16 %v355
  %v425 = vunpack.c.l.b16 %v356
  %v426 = vunpack.c.l.b16 %v357
  %v427 = vunpack.c.l.b16 %v358
  %v428 = vunpack.c.l.b16 %v359
  %v429 = vunpack.c.l.b16 %v360
  %v430 = vunpack.c.l.b16 %v361
  %v431 = vpack.c.b16 %v416, %v415
  %v432 = vpack.c.b16 %v418, %v417
  %v433 = vpack.c.b16 %v420, %v419
  %v434 = vpack.c.b16 %v422, %v421
  %v435 = vpack.c.b16 %v424, %v423
  %v436 = vpack.c.b16 %v426, %v425
  %v437 = vpack.c.b16 %v428, %v427
  %v438 = vpack.c.b16 %v430, %v429
  %447 = vmatprep.subr.bf16.mxu0 0
  %448 = vmatpush1.bf16.msra.mxu0 %v438
  %449 = vmatprep.subr.bf16.mxu0 0
  %450 = vmatpush1.bf16.msra.mxu0 %v437
  %451 = vmatprep.subr.bf16.mxu0 0
  %452 = vmatpush1.bf16.msra.mxu0 %v436
  %453 = vmatprep.subr.bf16.mxu0 0
  %454 = vmatpush1.bf16.msra.mxu0 %v435
  %455 = vmatprep.subr.bf16.mxu0 0
  %456 = vmatpush1.bf16.msra.mxu0 %v434
  %457 = vmatprep.subr.bf16.mxu0 0
  %458 = vmatpush1.bf16.msra.mxu0 %v433
  %459 = vmatprep.subr.bf16.mxu0 0
  %460 = vmatpush1.bf16.msra.mxu0 %v432
  %461 = vmatprep.subr.bf16.mxu0 0
  %462 = vmatpush1.bf16.msra.mxu0 %v431
  %463 = vmatprep.subr.bf16.mxu0 0
  %464 = vmatpush2.bf16.msra.mxu0 0
  %465 = vmatprep.subr.bf16.mxu0 0
  %466 = vmatpush2.bf16.msra.mxu0 0
  %467 = vmatprep.subr.bf16.mxu0 0
  %468 = vmatpush2.bf16.msra.mxu0 0
  %469 = vmatprep.subr.bf16.mxu0 0
  %470 = vmatpush2.bf16.msra.mxu0 0
  %471 = vmatprep.subr.bf16.mxu0 0
  %472 = vmatpush2.bf16.msra.mxu0 0
  %473 = vmatprep.subr.bf16.mxu0 0
  %474 = vmatpush2.bf16.msra.mxu0 0
  %475 = vmatprep.subr.bf16.mxu0 0
  %476 = vmatpush2.bf16.msra.mxu0 0
  %477 = vmatprep.subr.bf16.mxu0 0
  %478 = vmatpush2.bf16.msra.mxu0 0
  %479 = vmatprep.mubr.bf16.mxu0 0
  %480 = vmatmul.mubr.bf16.gmra.mxu0 %v397
  %v481 = vpop.f32.mrf.mxu0
  %v482 = vadd.f32 %v366, %v481
  %v483 = vpop.f32.mrf.mxu0
  %v484 = vpop.f32.mrf.mxu0
  %v485 = vpop.f32.mrf.mxu0
  %486 = vdwg.mxu0
  %v487 = vxor.u32 %v482, 2147483648
  %v488 = vmul.f32 %v487, 1.442695
  %v489 = vpow.pop %v488
  %v490 = vadd.f32 %v489, 1.0
  %v491 = vrcp.pop %v490
  %v492 = vmul.f32 1.0, %v491
  %493 = vst [vmem:[%s4] sm:$0xff] %v492
  // Predicated region
  $region18: #{textcnn_forward.1} parent=0 // pred_check
    _
  $region19: #{textcnn_forward.1} parent=0 // pred_check_branch
    %495 = sbr.rel (0) target = $region21
  $region20: #{textcnn_forward.1} parent=0 // pred_region
    _
  $region21: #{textcnn_forward.1} parent=0 // pred_fallthru
    _
  // Predicated region
  $region22: #{textcnn_forward.1} parent=0 // pred_check
    _
  $region23: #{textcnn_forward.1} parent=0 // pred_check_branch
    %497 = sbr.rel (0) target = $region25
  $region24: #{textcnn_forward.1} parent=0 // pred_region
    _
  $region25: #{textcnn_forward.1} parent=0 // pred_fallthru
    _

</llo_original>
